<compile_context>
chip_gen: v5e
topology: v5e:2x2
jax: 0.10.0
libtpu: 0.0.40
codegen_flags: <defaults>
</compile_context>

<pallas_src>
import math
from functools import partial

import jax
import jax.numpy as jnp
from jax.experimental import pallas as pl
from jax.experimental.pallas import tpu as pltpu


def _gelu(x):
    # exact (erf) GELU, matching torch.nn.GELU default
    return 0.5 * x * (1.0 + jax.lax.erf(x * (1.0 / math.sqrt(2.0))))


def _channel_out(xb, w_ev, b_ev, w_od, b_od, *, c, n):
    """xb: (num_old, 4c).  Returns (num_new, 8c) in the PyTorch cat/transpose order.

    w_ev = [W00; W01] (2n, num_old), b_ev = [b00; b01] (2n, 1);  w_od/b_od likewise for
    channel1_0/channel1_1.  Only the needed output columns are ever computed.
    """
    # even weights only ever see input blocks 0 and 2; odd weights only blocks 1 and 3
    x_even = jnp.concatenate([xb[:, 0 * c:1 * c], xb[:, 2 * c:3 * c]], axis=-1)  # (num_old, 2c)
    x_odd = jnp.concatenate([xb[:, 1 * c:2 * c], xb[:, 3 * c:4 * c]], axis=-1)   # (num_old, 2c)

    # Two stacked matmuls per batch element (instead of four), fp32 accumulation on the MXU.
    a_ev = _gelu(jnp.dot(w_ev, x_even, preferred_element_type=jnp.float32) + b_ev)  # (2n, 2c)
    a_od = _gelu(jnp.dot(w_od, x_odd, preferred_element_type=jnp.float32) + b_od)   # (2n, 2c)

    e0, e1 = a_ev[:n, :], a_ev[n:, :]   # W00(...), W01(...)
    o0, o1 = a_od[:n, :], a_od[n:, :]   # W10(...), W11(...)

    # cat([x0_0,x0_1,x1_0,x1_1,x2_0,x2_1,x3_0,x3_1], 1).transpose(1,2) assembled directly:
    return jnp.concatenate([
        e0[:, 0:c], e1[:, 0:c], o0[:, 0:c], o1[:, 0:c],          # x0_0, x0_1, x1_0, x1_1
        e0[:, c:2 * c], e1[:, c:2 * c], o0[:, c:2 * c], o1[:, c:2 * c],  # x2_0, x2_1, x3_0, x3_1
    ], axis=-1)                                                   # (num_new, 8c)


# ---------------------------------------------------------------------------
# Kernels: one grid step == one batch element.
# ---------------------------------------------------------------------------
def fc_inter_kernel(x_ref, cls_ref, wev_ref, bev_ref, wod_ref, bod_ref,
                    wfc_ref, bfc_ref, xout_ref, clsout_ref, *, c, n):
    xb = x_ref[0]                                                  # (num_old, dim_old)
    out = _channel_out(xb, wev_ref[...], bev_ref[...], wod_ref[...], bod_ref[...], c=c, n=n)
    xout_ref[...] = out[None].astype(xout_ref.dtype)               # one lane-dense full-block store

    # fc(cls_token) for this batch element: (1, dim_old) @ (dim_old, dim_new)
    co = jnp.dot(cls_ref[0], wfc_ref[...], preferred_element_type=jnp.float32) + bfc_ref[...]
    clsout_ref[...] = co[None].astype(clsout_ref.dtype)


def fc_inter_kernel_nocls(x_ref, wev_ref, bev_ref, wod_ref, bod_ref, xout_ref, *, c, n):
    xb = x_ref[0]
    out = _channel_out(xb, wev_ref[...], bev_ref[...], wod_ref[...], bod_ref[...], c=c, n=n)
    xout_ref[...] = out[None].astype(xout_ref.dtype)


# ---------------------------------------------------------------------------
# Wrapper
# ---------------------------------------------------------------------------
def fc_inter_forward(params, x, cls_token=None):
    """x: (B, num_old, dim_old); cls_token: (B, 1, dim_old) or None."""
    B, num_old, dim_old = x.shape
    assert dim_old % 4 == 0
    c = dim_old // 4
    num_new = params["w00"].shape[0]
    dim_new = params["wfc"].shape[1]

    # Fold the 4 channel linears into 2 stacked MXU operands (tiny XLA concats, once per call).
    w_ev = jnp.concatenate([params["w00"], params["w01"]], axis=0)   # (2n, num_old)
    b_ev = jnp.concatenate([params["b00"], params["b01"]], axis=0)   # (2n, 1)
    w_od = jnp.concatenate([params["w10"], params["w11"]], axis=0)
    b_od = jnp.concatenate([params["b10"], params["b11"]], axis=0)

    # Per-batch blocks for activations; constant-index blocks for weights (stay VMEM-resident).
    x_spec = pl.BlockSpec((1, num_old, dim_old), lambda b: (b, 0, 0))
    xout_spec = pl.BlockSpec((1, num_new, 2 * dim_old), lambda b: (b, 0, 0))
    wev_spec = pl.BlockSpec((2 * num_new, num_old), lambda b: (0, 0))
    bev_spec = pl.BlockSpec((2 * num_new, 1), lambda b: (0, 0))
    wod_spec = pl.BlockSpec((2 * num_new, num_old), lambda b: (0, 0))
    bod_spec = pl.BlockSpec((2 * num_new, 1), lambda b: (0, 0))

    cparams = pltpu.CompilerParams(dimension_semantics=("parallel",))

    if cls_token is None:
        x_out = pl.pallas_call(
            partial(fc_inter_kernel_nocls, c=c, n=num_new),
            grid=(B,),
            in_specs=[x_spec, wev_spec, bev_spec, wod_spec, bod_spec],
            out_specs=xout_spec,
            out_shape=jax.ShapeDtypeStruct((B, num_new, 2 * dim_old), jnp.float32),
            compiler_params=cparams,
        )(x, w_ev, b_ev, w_od, b_od)
        return x_out

    cls3 = cls_token.reshape(B, 1, dim_old)
    cls_spec = pl.BlockSpec((1, 1, dim_old), lambda b: (b, 0, 0))
    clsout_spec = pl.BlockSpec((1, 1, dim_new), lambda b: (b, 0, 0))
    wfc_spec = pl.BlockSpec((dim_old, dim_new), lambda b: (0, 0))
    bfc_spec = pl.BlockSpec((1, dim_new), lambda b: (0, 0))

    x_out, cls_out = pl.pallas_call(
        partial(fc_inter_kernel, c=c, n=num_new),
        grid=(B,),
        in_specs=[x_spec, cls_spec, wev_spec, bev_spec, wod_spec, bod_spec, wfc_spec, bfc_spec],
        out_specs=(xout_spec, clsout_spec),
        out_shape=(
            jax.ShapeDtypeStruct((B, num_new, 2 * dim_old), jnp.float32),
            jax.ShapeDtypeStruct((B, 1, dim_new), jnp.float32),
        ),
        compiler_params=cparams,
    )(x, cls3, w_ev, b_ev, w_od, b_od, params["wfc"], params["bfc"])
    return x_out, cls_out.reshape(cls_token.shape[:-1] + (dim_new,))


# ---------------------------------------------------------------------------
# Parameters (deterministic, mirrors nn.Linear default init).  channel2_*/channel3_* are
# defined in the PyTorch module but never used in forward, so they are not created here.
# ---------------------------------------------------------------------------
def _linear(key, fan_in, fan_out):
    kw, kb = jax.random.split(key)
    bound = 1.0 / math.sqrt(fan_in)
    w = jax.random.uniform(kw, (fan_out, fan_in), jnp.float32, -bound, bound)  # torch layout
    b = jax.random.uniform(kb, (fan_out,), jnp.float32, -bound, bound)
    return w, b


def init_fc_inter_params(key, num_old, num_new, dim_old, dim_new):
    ks = jax.random.split(key, 5)
    p = {}
    for name, k in zip(("00", "01", "10", "11"), ks[:4]):
        w, b = _linear(k, num_old, num_new)
        p["w" + name] = w                      # (num_new, num_old)   torch (out, in) layout
        p["b" + name] = b.reshape(num_new, 1)  # column vector for W @ x + b broadcast
    wfc, bfc = _linear(ks[4], dim_old, dim_new)
    p["wfc"] = wfc.T                           # (dim_old, dim_new)
    p["bfc"] = bfc.reshape(1, dim_new)
    return p


# ---------------------------------------------------------------------------
# Pure-JAX reference that literally mirrors the PyTorch forward.
# ---------------------------------------------------------------------------
def fc_inter_reference(params, x, cls_token):
    c = x.shape[2] // 4
    xt = jnp.swapaxes(x, 1, 2)                                    # (B, dim_old, num_old)

    def ch(xc, w, b):
        return _gelu(xc @ w.T + b.reshape(1, 1, -1))

    x0, x1 = xt[:, 0 * c:1 * c], xt[:, 1 * c:2 * c]
    x2, x3 = xt[:, 2 * c:3 * c], xt[:, 3 * c:4 * c]
    cat = jnp.concatenate([
        ch(x0, params["w00"], params["b00"]), ch(x0, params["w01"], params["b01"]),
        ch(x1, params["w10"], params["b10"]), ch(x1, params["w11"], params["b11"]),
        ch(x2, params["w00"], params["b00"]), ch(x2, params["w01"], params["b01"]),
        ch(x3, params["w10"], params["b10"]), ch(x3, params["w11"], params["b11"]),
    ], axis=1)
    x_out = jnp.swapaxes(cat, 1, 2)                               # (B, num_new, 2*dim_old)
    cls_out = cls_token @ params["wfc"] + params["bfc"]           # (B, 1, dim_new)
    return x_out, cls_out


if __name__ == "__main__":
    B, num_old, num_new, dim_old, dim_new = 2, 8, 6, 16, 32
    key = jax.random.PRNGKey(0)
    kx, kc, kp = jax.random.split(key, 3)
    x = jax.random.normal(kx, (B, num_old, dim_old), jnp.float32)
    cls_token = jax.random.normal(kc, (B, 1, dim_old), jnp.float32)
    params = init_fc_inter_params(kp, num_old, num_new, dim_old, dim_new)

    fwd = jax.jit(fc_inter_forward)

    # with cls_token
    x_out, cls_out = fwd(params, x, cls_token)
    jax.block_until_ready((x_out, cls_out))
    assert x_out.shape == (B, num_new, 2 * dim_old)
    assert cls_out.shape == (B, 1, dim_new)

    # without cls_token (separate kernel variant, no dummy cls work)
    x_out_nc = fwd(params, x)
    jax.block_until_ready(x_out_nc)
    assert x_out_nc.shape == (B, num_new, 2 * dim_old)

    x_ref_out, cls_ref_out = fc_inter_reference(params, x, cls_token)
    assert jnp.allclose(x_out, x_ref_out, rtol=1e-4, atol=1e-4)
    assert jnp.allclose(x_out_nc, x_ref_out, rtol=1e-4, atol=1e-4)
    assert jnp.allclose(cls_out, cls_ref_out, rtol=1e-4, atol=1e-4)
    print("KERNEL_OK")
</pallas_src>

<mosaic_0001>
module attributes {stable_mosaic.version = 11 : i64} {
  func.func @fc_inter_kernel(%arg0: i32, %arg1: memref<1x8x16xf32, #tpu.memory_space<vmem>>, %arg2: memref<1x1x16xf32, #tpu.memory_space<vmem>>, %arg3: memref<12x8xf32, #tpu.memory_space<vmem>>, %arg4: memref<12x1xf32, #tpu.memory_space<vmem>>, %arg5: memref<12x8xf32, #tpu.memory_space<vmem>>, %arg6: memref<12x1xf32, #tpu.memory_space<vmem>>, %arg7: memref<16x32xf32, #tpu.memory_space<vmem>>, %arg8: memref<1x32xf32, #tpu.memory_space<vmem>>, %arg9: memref<1x6x32xf32, #tpu.memory_space<vmem>>, %arg10: memref<1x1x32xf32, #tpu.memory_space<vmem>>) attributes {dimension_semantics = [#tpu.dimension_semantics<parallel>], iteration_bounds = array<i64: 2>, scalar_prefetch = 0 : i64, scratch_operands = 0 : i64, tpu.core_type = #tpu.core_type<tc>, window_params = [{transform_indices = @transform_0, window_bounds = array<i64: 1, 8, 16>}, {transform_indices = @transform_1, window_bounds = array<i64: 1, 1, 16>}, {pipeline_mode = #tpu.pipeline_mode<synchronous>, transform_indices = @transform_2, window_bounds = array<i64: 12, 8>}, {pipeline_mode = #tpu.pipeline_mode<synchronous>, transform_indices = @transform_3, window_bounds = array<i64: 12, 1>}, {pipeline_mode = #tpu.pipeline_mode<synchronous>, transform_indices = @transform_4, window_bounds = array<i64: 12, 8>}, {pipeline_mode = #tpu.pipeline_mode<synchronous>, transform_indices = @transform_5, window_bounds = array<i64: 12, 1>}, {pipeline_mode = #tpu.pipeline_mode<synchronous>, transform_indices = @transform_6, window_bounds = array<i64: 16, 32>}, {pipeline_mode = #tpu.pipeline_mode<synchronous>, transform_indices = @transform_7, window_bounds = array<i64: 1, 32>}, {transform_indices = @transform_8, window_bounds = array<i64: 1, 6, 32>}, {transform_indices = @transform_9, window_bounds = array<i64: 1, 1, 32>}]} {
    %c0 = arith.constant 0 : index
    %c0_0 = arith.constant 0 : index
    %c0_1 = arith.constant 0 : index
    %0 = vector.load %arg1[%c0, %c0_0, %c0_1] : memref<1x8x16xf32, #tpu.memory_space<vmem>>, vector<1x8x16xf32>
    %1 = vector.shape_cast %0 : vector<1x8x16xf32> to vector<8x16xf32>
    %c0_2 = arith.constant 0 : index
    %c0_3 = arith.constant 0 : index
    %2 = vector.load %arg3[%c0_2, %c0_3] : memref<12x8xf32, #tpu.memory_space<vmem>>, vector<12x8xf32>
    %c0_4 = arith.constant 0 : index
    %c0_5 = arith.constant 0 : index
    %3 = vector.load %arg4[%c0_4, %c0_5] : memref<12x1xf32, #tpu.memory_space<vmem>>, vector<12x1xf32>
    %c0_6 = arith.constant 0 : index
    %c0_7 = arith.constant 0 : index
    %4 = vector.load %arg5[%c0_6, %c0_7] : memref<12x8xf32, #tpu.memory_space<vmem>>, vector<12x8xf32>
    %c0_8 = arith.constant 0 : index
    %c0_9 = arith.constant 0 : index
    %5 = vector.load %arg6[%c0_8, %c0_9] : memref<12x1xf32, #tpu.memory_space<vmem>>, vector<12x1xf32>
    %6 = vector.extract_strided_slice %1 {offsets = [0, 0], sizes = [8, 4], strides = [1, 1]} : vector<8x16xf32> to vector<8x4xf32>
    %7 = vector.extract_strided_slice %1 {offsets = [0, 8], sizes = [8, 4], strides = [1, 1]} : vector<8x16xf32> to vector<8x4xf32>
    %8 = tpu.concatenate %6, %7 in 1 : vector<8x4xf32>, vector<8x4xf32> -> vector<8x8xf32>
    %9 = vector.extract_strided_slice %1 {offsets = [0, 4], sizes = [8, 4], strides = [1, 1]} : vector<8x16xf32> to vector<8x4xf32>
    %10 = vector.extract_strided_slice %1 {offsets = [0, 12], sizes = [8, 4], strides = [1, 1]} : vector<8x16xf32> to vector<8x4xf32>
    %11 = tpu.concatenate %9, %10 in 1 : vector<8x4xf32>, vector<8x4xf32> -> vector<8x8xf32>
    %cst = arith.constant dense<0.000000e+00> : vector<12x8xf32>
    %12 = tpu.matmul %2, %8, %cst {dimension_numbers = #tpu.dot_dimension_numbers<[1], [0], [0], [1], [0, 0, 1, 1], [], []>} : vector<12x8xf32>, vector<8x8xf32>, vector<12x8xf32> -> vector<12x8xf32>
    %13 = vector.broadcast %3 : vector<12x1xf32> to vector<12x8xf32>
    %14 = arith.addf %12, %13 : vector<12x8xf32>
    %cst_10 = arith.constant 5.000000e-01 : f32
    %15 = vector.broadcast %cst_10 : f32 to vector<12x8xf32>
    %16 = arith.mulf %15, %14 : vector<12x8xf32>
    %cst_11 = arith.constant 0.707106769 : f32
    %17 = vector.broadcast %cst_11 : f32 to vector<12x8xf32>
    %18 = arith.mulf %14, %17 : vector<12x8xf32>
    %19 = math.erf %18 : vector<12x8xf32>
    %cst_12 = arith.constant 1.000000e+00 : f32
    %20 = vector.broadcast %cst_12 : f32 to vector<12x8xf32>
    %21 = arith.addf %20, %19 : vector<12x8xf32>
    %22 = arith.mulf %16, %21 : vector<12x8xf32>
    %cst_13 = arith.constant dense<0.000000e+00> : vector<12x8xf32>
    %23 = tpu.matmul %4, %11, %cst_13 {dimension_numbers = #tpu.dot_dimension_numbers<[1], [0], [0], [1], [0, 0, 1, 1], [], []>} : vector<12x8xf32>, vector<8x8xf32>, vector<12x8xf32> -> vector<12x8xf32>
    %24 = vector.broadcast %5 : vector<12x1xf32> to vector<12x8xf32>
    %25 = arith.addf %23, %24 : vector<12x8xf32>
    %cst_14 = arith.constant 5.000000e-01 : f32
    %26 = vector.broadcast %cst_14 : f32 to vector<12x8xf32>
    %27 = arith.mulf %26, %25 : vector<12x8xf32>
    %cst_15 = arith.constant 0.707106769 : f32
    %28 = vector.broadcast %cst_15 : f32 to vector<12x8xf32>
    %29 = arith.mulf %25, %28 : vector<12x8xf32>
    %30 = math.erf %29 : vector<12x8xf32>
    %cst_16 = arith.constant 1.000000e+00 : f32
    %31 = vector.broadcast %cst_16 : f32 to vector<12x8xf32>
    %32 = arith.addf %31, %30 : vector<12x8xf32>
    %33 = arith.mulf %27, %32 : vector<12x8xf32>
    %34 = vector.extract_strided_slice %22 {offsets = [0, 0], sizes = [6, 8], strides = [1, 1]} : vector<12x8xf32> to vector<6x8xf32>
    %35 = vector.extract_strided_slice %22 {offsets = [6, 0], sizes = [6, 8], strides = [1, 1]} : vector<12x8xf32> to vector<6x8xf32>
    %36 = vector.extract_strided_slice %33 {offsets = [0, 0], sizes = [6, 8], strides = [1, 1]} : vector<12x8xf32> to vector<6x8xf32>
    %37 = vector.extract_strided_slice %33 {offsets = [6, 0], sizes = [6, 8], strides = [1, 1]} : vector<12x8xf32> to vector<6x8xf32>
    %38 = vector.extract_strided_slice %34 {offsets = [0, 0], sizes = [6, 4], strides = [1, 1]} : vector<6x8xf32> to vector<6x4xf32>
    %39 = vector.extract_strided_slice %35 {offsets = [0, 0], sizes = [6, 4], strides = [1, 1]} : vector<6x8xf32> to vector<6x4xf32>
    %40 = vector.extract_strided_slice %36 {offsets = [0, 0], sizes = [6, 4], strides = [1, 1]} : vector<6x8xf32> to vector<6x4xf32>
    %41 = vector.extract_strided_slice %37 {offsets = [0, 0], sizes = [6, 4], strides = [1, 1]} : vector<6x8xf32> to vector<6x4xf32>
    %42 = vector.extract_strided_slice %34 {offsets = [0, 4], sizes = [6, 4], strides = [1, 1]} : vector<6x8xf32> to vector<6x4xf32>
    %43 = vector.extract_strided_slice %35 {offsets = [0, 4], sizes = [6, 4], strides = [1, 1]} : vector<6x8xf32> to vector<6x4xf32>
    %44 = vector.extract_strided_slice %36 {offsets = [0, 4], sizes = [6, 4], strides = [1, 1]} : vector<6x8xf32> to vector<6x4xf32>
    %45 = vector.extract_strided_slice %37 {offsets = [0, 4], sizes = [6, 4], strides = [1, 1]} : vector<6x8xf32> to vector<6x4xf32>
    %46 = tpu.concatenate %38, %39, %40, %41, %42, %43, %44, %45 in 1 : vector<6x4xf32>, vector<6x4xf32>, vector<6x4xf32>, vector<6x4xf32>, vector<6x4xf32>, vector<6x4xf32>, vector<6x4xf32>, vector<6x4xf32> -> vector<6x32xf32>
    %47 = vector.shape_cast %46 : vector<6x32xf32> to vector<1x6x32xf32>
    %c0_17 = arith.constant 0 : index
    %c0_18 = arith.constant 0 : index
    %c0_19 = arith.constant 0 : index
    %48 = vector.load %arg9[%c0_17, %c0_18, %c0_19] : memref<1x6x32xf32, #tpu.memory_space<vmem>>, vector<1x6x32xf32>
    tpu.vector_store %arg9[%c0_17, %c0_18, %c0_19], %47 {strides = array<i32>} : memref<1x6x32xf32, #tpu.memory_space<vmem>>, vector<1x6x32xf32>,
    %c0_20 = arith.constant 0 : index
    %c0_21 = arith.constant 0 : index
    %c0_22 = arith.constant 0 : index
    %49 = vector.load %arg2[%c0_20, %c0_21, %c0_22] : memref<1x1x16xf32, #tpu.memory_space<vmem>>, vector<1x1x16xf32>
    %50 = vector.shape_cast %49 : vector<1x1x16xf32> to vector<1x16xf32>
    %c0_23 = arith.constant 0 : index
    %c0_24 = arith.constant 0 : index
    %51 = vector.load %arg7[%c0_23, %c0_24] : memref<16x32xf32, #tpu.memory_space<vmem>>, vector<16x32xf32>
    %cst_25 = arith.constant dense<0.000000e+00> : vector<1x32xf32>
    %52 = tpu.matmul %50, %51, %cst_25 {dimension_numbers = #tpu.dot_dimension_numbers<[1], [0], [0], [1], [0, 0, 1, 1], [], []>} : vector<1x16xf32>, vector<16x32xf32>, vector<1x32xf32> -> vector<1x32xf32>
    %c0_26 = arith.constant 0 : index
    %c0_27 = arith.constant 0 : index
    %53 = vector.load %arg8[%c0_26, %c0_27] : memref<1x32xf32, #tpu.memory_space<vmem>>, vector<1x32xf32>
    %54 = arith.addf %52, %53 : vector<1x32xf32>
    %55 = vector.shape_cast %54 : vector<1x32xf32> to vector<1x1x32xf32>
    %c0_28 = arith.constant 0 : index
    %c0_29 = arith.constant 0 : index
    %c0_30 = arith.constant 0 : index
    %56 = vector.load %arg10[%c0_28, %c0_29, %c0_30] : memref<1x1x32xf32, #tpu.memory_space<vmem>>, vector<1x1x32xf32>
    tpu.vector_store %arg10[%c0_28, %c0_29, %c0_30], %55 {strides = array<i32>} : memref<1x1x32xf32, #tpu.memory_space<vmem>>, vector<1x1x32xf32>,
    return
  }
  func.func @transform_0(%arg0: i32) -> (i32, i32, i32) {
    %c0_i32 = arith.constant 0 : i32
    %c0_i32_0 = arith.constant 0 : i32
    %c0_i32_1 = arith.constant 0 : i32
    return %arg0, %c0_i32, %c0_i32_0 : i32, i32, i32
  }
  func.func @transform_1(%arg0: i32) -> (i32, i32, i32) {
    %c0_i32 = arith.constant 0 : i32
    %c0_i32_0 = arith.constant 0 : i32
    %c0_i32_1 = arith.constant 0 : i32
    return %arg0, %c0_i32, %c0_i32_0 : i32, i32, i32
  }
  func.func @transform_2(%arg0: i32) -> (i32, i32) {
    %c0_i32 = arith.constant 0 : i32
    %c0_i32_0 = arith.constant 0 : i32
    %c0_i32_1 = arith.constant 0 : i32
    return %c0_i32, %c0_i32_0 : i32, i32
  }
  func.func @transform_3(%arg0: i32) -> (i32, i32) {
    %c0_i32 = arith.constant 0 : i32
    %c0_i32_0 = arith.constant 0 : i32
    %c0_i32_1 = arith.constant 0 : i32
    return %c0_i32, %c0_i32_0 : i32, i32
  }
  func.func @transform_4(%arg0: i32) -> (i32, i32) {
    %c0_i32 = arith.constant 0 : i32
    %c0_i32_0 = arith.constant 0 : i32
    %c0_i32_1 = arith.constant 0 : i32
    return %c0_i32, %c0_i32_0 : i32, i32
  }
  func.func @transform_5(%arg0: i32) -> (i32, i32) {
    %c0_i32 = arith.constant 0 : i32
    %c0_i32_0 = arith.constant 0 : i32
    %c0_i32_1 = arith.constant 0 : i32
    return %c0_i32, %c0_i32_0 : i32, i32
  }
  func.func @transform_6(%arg0: i32) -> (i32, i32) {
    %c0_i32 = arith.constant 0 : i32
    %c0_i32_0 = arith.constant 0 : i32
    %c0_i32_1 = arith.constant 0 : i32
    return %c0_i32, %c0_i32_0 : i32, i32
  }
  func.func @transform_7(%arg0: i32) -> (i32, i32) {
    %c0_i32 = arith.constant 0 : i32
    %c0_i32_0 = arith.constant 0 : i32
    %c0_i32_1 = arith.constant 0 : i32
    return %c0_i32, %c0_i32_0 : i32, i32
  }
  func.func @transform_8(%arg0: i32) -> (i32, i32, i32) {
    %c0_i32 = arith.constant 0 : i32
    %c0_i32_0 = arith.constant 0 : i32
    %c0_i32_1 = arith.constant 0 : i32
    return %arg0, %c0_i32, %c0_i32_0 : i32, i32, i32
  }
  func.func @transform_9(%arg0: i32) -> (i32, i32, i32) {
    %c0_i32 = arith.constant 0 : i32
    %c0_i32_0 = arith.constant 0 : i32
    %c0_i32_1 = arith.constant 0 : i32
    return %arg0, %c0_i32, %c0_i32_0 : i32, i32, i32
  }
}

</mosaic_0001>

<llo_original>
// kernel: fc_inter_forward.1
$region0: #{fc_inter_forward.1}
  #allocation0 [shape = 'u32[]', space=smem, size = 0x4, offset = 0x4, fixed_abs, tag = 'smem constant byte address 0x4 - core index']
  #allocation1 [shape = 'u32[72,128]{1,0:T(1,128)}', space=vmem, size = 0x9000, scoped, tag = 'internal scratch']
  %s0 = inlined_call_operand.vmem [shape: f32[2,8,16], index: 0, kind: input, shape index: {}]
  %s1 = inlined_call_operand.vmem [shape: f32[2,1,16], index: 1, kind: input, shape index: {}]
  %s2 = inlined_call_operand.vmem [shape: f32[12,8], index: 2, kind: input, shape index: {}]
  %s3 = inlined_call_operand.vmem [shape: f32[12,1], index: 3, kind: input, shape index: {}]
  %s4 = inlined_call_operand.vmem [shape: f32[12,8], index: 4, kind: input, shape index: {}]
  %s5 = inlined_call_operand.vmem [shape: f32[12,1], index: 5, kind: input, shape index: {}]
  %s6 = inlined_call_operand.vmem [shape: f32[16,32], index: 6, kind: input, shape index: {}]
  %s7 = inlined_call_operand.vmem [shape: f32[1,32], index: 7, kind: input, shape index: {}]
  %s8 = inlined_call_operand.vmem [shape: f32[2,6,32], index: 8, kind: output, shape index: {0}]
  %s9 = inlined_call_operand.hbm [shape: f32[2,1,32], index: 9, kind: output, shape index: {1}]
  %10 = xla_tuple %s8, %s9
  %s11 = sld [smem:[#allocation0]]
  $region73: #{fc_inter_forward.1} parent=0
    _
  %s13 = ssub.s32 1, %s11
  %s14 = scalar_select 0, %s13, %s11
  $region1: #{fc_inter_forward.1} parent=0
    #allocation2 [shape = 'u8[1024]{0}', space=vmem, size = 0x400, scoped, tag = 'output window, operand 1']
    #allocation3 [shape = 's32[2]{0}', space=sflag, size = 0x8, scoped, tag = 'scoped memory for fc_inter_forward.1']
    %15 = vsyncpa [#allocation3], 0
    %s16 = scalar_lea.sflag [#allocation3], 1
    %17 = vsyncpa %s16, 0
    loop: start=0, step=1, limit=4
    $region2: #{fc_inter_forward.1} parent=1 // loop_pre_header
      _
    $region3: #{fc_inter_forward.1} parent=1 // loop_header
      %s19 = sphi 0, %s23
      %p20 = scmp.ge.s32.totalorder %s19, 4
      %s29 = sphi 0, %s31
      %s32 = sphi 0, %s29
      %s33 = sphi 0, %s32
      %s49 = sphi 0, %s33
      %s55 = sphi 0, %s57
      %s58 = sphi 0, %s55
      %s59 = sphi 0, %s58
      %s75 = sphi 0, %s59
      %s79 = sphi 0, %s79
      %s81 = sphi 0, %s79
      %s82 = sphi 0, %s81
      %s96 = sphi 0, %s82
      %s100 = sphi 0, %s100
      %s102 = sphi 0, %s100
      %s103 = sphi 0, %s102
      %s117 = sphi 0, %s103
      %s121 = sphi 0, %s121
      %s123 = sphi 0, %s121
      %s124 = sphi 0, %s123
      %s138 = sphi 0, %s124
      %s142 = sphi 0, %s142
      %s144 = sphi 0, %s142
      %s145 = sphi 0, %s144
      %s159 = sphi 0, %s145
      %s163 = sphi 0, %s163
      %s165 = sphi 0, %s163
      %s166 = sphi 0, %s165
      %s180 = sphi 0, %s166
      %s184 = sphi 0, %s184
      %s186 = sphi 0, %s184
      %s187 = sphi 0, %s186
      %s201 = sphi 0, %s187
      %s207 = sphi 0, %s209
      %s210 = sphi 0, %s207
      %s211 = sphi 0, %s210
      %s227 = sphi 0, %s211
      %s233 = sphi 0, %s235
      %s236 = sphi 0, %s233
      %s237 = sphi 0, %s236
      %s253 = sphi 0, %s237
    $region4: #{fc_inter_forward.1} parent=1 // loop_header_branch
      %22 = sbr.rel (%p20) target = $region8
    $region5: #{fc_inter_forward.1} parent=1 // loop_body
      %s24 = ssub.s32 %s19, 1
      %s25 = ssub.s32 %s19, 2
      %s26 = sadd.s32 %s19, 1
      %s27 = ssub.s32 %s19, %s26
      %p28 = scmp.eq.s32.totalorder %s27, 0
      %s30 = sadd.s32 %s29, 1
      %s31 = scalar_select %p28, %s29, %s30
      %p34 = pneg %p28
      %p35 = scmp.eq.s32.totalorder %s19, 1
      %p36 = por %p34, %p35
      %p37 = scmp.ne.s32.totalorder %s29, %s32
      %p38 = scmp.eq.s32.totalorder %s19, 0
      %p39 = por %p37, %p38
      %p40 = scmp.ne.s32.totalorder %s29, %s32
      %p41 = scmp.eq.s32.totalorder %s24, 1
      %p42 = por %p40, %p41
      %p43 = scmp.ne.s32.totalorder %s32, %s33
      %p44 = scmp.eq.s32.totalorder %s24, 0
      %p45 = por %p43, %p44
      %p46 = scmp.ne.s32.totalorder %s32, %s33
      %p47 = scmp.eq.s32.totalorder %s25, 1
      %p48 = por %p46, %p47
      %p50 = scmp.ne.s32.totalorder %s33, %s49
      %p51 = scmp.eq.s32.totalorder %s25, 0
      %p52 = por %p50, %p51
      %s53 = ssub.s32 %s19, %s26
      %p54 = scmp.eq.s32.totalorder %s53, 0
      %s56 = sadd.s32 %s55, 1
      %s57 = scalar_select %p54, %s55, %s56
      %p60 = pneg %p54
      %p61 = scmp.eq.s32.totalorder %s19, 1
      %p62 = por %p60, %p61
      %p63 = scmp.ne.s32.totalorder %s55, %s58
      %p64 = scmp.eq.s32.totalorder %s19, 0
      %p65 = por %p63, %p64
      %p66 = scmp.ne.s32.totalorder %s55, %s58
      %p67 = scmp.eq.s32.totalorder %s24, 1
      %p68 = por %p66, %p67
      %p69 = scmp.ne.s32.totalorder %s58, %s59
      %p70 = scmp.eq.s32.totalorder %s24, 0
      %p71 = por %p69, %p70
      %p72 = scmp.ne.s32.totalorder %s58, %s59
      %p73 = scmp.eq.s32.totalorder %s25, 1
      %p74 = por %p72, %p73
      %p76 = scmp.ne.s32.totalorder %s59, %s75
      %p77 = scmp.eq.s32.totalorder %s25, 0
      %p78 = por %p76, %p77
      %s80 = sadd.s32 %s79, 1
      %p83 = scmp.eq.s32.totalorder %s19, 1
      %p84 = scmp.ne.s32.totalorder %s79, %s81
      %p85 = scmp.eq.s32.totalorder %s19, 0
      %p86 = por %p84, %p85
      %p87 = scmp.ne.s32.totalorder %s79, %s81
      %p88 = scmp.eq.s32.totalorder %s24, 1
      %p89 = por %p87, %p88
      %p90 = scmp.ne.s32.totalorder %s81, %s82
      %p91 = scmp.eq.s32.totalorder %s24, 0
      %p92 = por %p90, %p91
      %p93 = scmp.ne.s32.totalorder %s81, %s82
      %p94 = scmp.eq.s32.totalorder %s25, 1
      %p95 = por %p93, %p94
      %p97 = scmp.ne.s32.totalorder %s82, %s96
      %p98 = scmp.eq.s32.totalorder %s25, 0
      %p99 = por %p97, %p98
      %s101 = sadd.s32 %s100, 1
      %p104 = scmp.eq.s32.totalorder %s19, 1
      %p105 = scmp.ne.s32.totalorder %s100, %s102
      %p106 = scmp.eq.s32.totalorder %s19, 0
      %p107 = por %p105, %p106
      %p108 = scmp.ne.s32.totalorder %s100, %s102
      %p109 = scmp.eq.s32.totalorder %s24, 1
      %p110 = por %p108, %p109
      %p111 = scmp.ne.s32.totalorder %s102, %s103
      %p112 = scmp.eq.s32.totalorder %s24, 0
      %p113 = por %p111, %p112
      %p114 = scmp.ne.s32.totalorder %s102, %s103
      %p115 = scmp.eq.s32.totalorder %s25, 1
      %p116 = por %p114, %p115
      %p118 = scmp.ne.s32.totalorder %s103, %s117
      %p119 = scmp.eq.s32.totalorder %s25, 0
      %p120 = por %p118, %p119
      %s122 = sadd.s32 %s121, 1
      %p125 = scmp.eq.s32.totalorder %s19, 1
      %p126 = scmp.ne.s32.totalorder %s121, %s123
      %p127 = scmp.eq.s32.totalorder %s19, 0
      %p128 = por %p126, %p127
      %p129 = scmp.ne.s32.totalorder %s121, %s123
      %p130 = scmp.eq.s32.totalorder %s24, 1
      %p131 = por %p129, %p130
      %p132 = scmp.ne.s32.totalorder %s123, %s124
      %p133 = scmp.eq.s32.totalorder %s24, 0
      %p134 = por %p132, %p133
      %p135 = scmp.ne.s32.totalorder %s123, %s124
      %p136 = scmp.eq.s32.totalorder %s25, 1
      %p137 = por %p135, %p136
      %p139 = scmp.ne.s32.totalorder %s124, %s138
      %p140 = scmp.eq.s32.totalorder %s25, 0
      %p141 = por %p139, %p140
      %s143 = sadd.s32 %s142, 1
      %p146 = scmp.eq.s32.totalorder %s19, 1
      %p147 = scmp.ne.s32.totalorder %s142, %s144
      %p148 = scmp.eq.s32.totalorder %s19, 0
      %p149 = por %p147, %p148
      %p150 = scmp.ne.s32.totalorder %s142, %s144
      %p151 = scmp.eq.s32.totalorder %s24, 1
      %p152 = por %p150, %p151
      %p153 = scmp.ne.s32.totalorder %s144, %s145
      %p154 = scmp.eq.s32.totalorder %s24, 0
      %p155 = por %p153, %p154
      %p156 = scmp.ne.s32.totalorder %s144, %s145
      %p157 = scmp.eq.s32.totalorder %s25, 1
      %p158 = por %p156, %p157
      %p160 = scmp.ne.s32.totalorder %s145, %s159
      %p161 = scmp.eq.s32.totalorder %s25, 0
      %p162 = por %p160, %p161
      %s164 = sadd.s32 %s163, 1
      %p167 = scmp.eq.s32.totalorder %s19, 1
      %p168 = scmp.ne.s32.totalorder %s163, %s165
      %p169 = scmp.eq.s32.totalorder %s19, 0
      %p170 = por %p168, %p169
      %p171 = scmp.ne.s32.totalorder %s163, %s165
      %p172 = scmp.eq.s32.totalorder %s24, 1
      %p173 = por %p171, %p172
      %p174 = scmp.ne.s32.totalorder %s165, %s166
      %p175 = scmp.eq.s32.totalorder %s24, 0
      %p176 = por %p174, %p175
      %p177 = scmp.ne.s32.totalorder %s165, %s166
      %p178 = scmp.eq.s32.totalorder %s25, 1
      %p179 = por %p177, %p178
      %p181 = scmp.ne.s32.totalorder %s166, %s180
      %p182 = scmp.eq.s32.totalorder %s25, 0
      %p183 = por %p181, %p182
      %s185 = sadd.s32 %s184, 1
      %p188 = scmp.eq.s32.totalorder %s19, 1
      %p189 = scmp.ne.s32.totalorder %s184, %s186
      %p190 = scmp.eq.s32.totalorder %s19, 0
      %p191 = por %p189, %p190
      %p192 = scmp.ne.s32.totalorder %s184, %s186
      %p193 = scmp.eq.s32.totalorder %s24, 1
      %p194 = por %p192, %p193
      %p195 = scmp.ne.s32.totalorder %s186, %s187
      %p196 = scmp.eq.s32.totalorder %s24, 0
      %p197 = por %p195, %p196
      %p198 = scmp.ne.s32.totalorder %s186, %s187
      %p199 = scmp.eq.s32.totalorder %s25, 1
      %p200 = por %p198, %p199
      %p202 = scmp.ne.s32.totalorder %s187, %s201
      %p203 = scmp.eq.s32.totalorder %s25, 0
      %p204 = por %p202, %p203
      %s205 = ssub.s32 %s19, %s26
      %p206 = scmp.eq.s32.totalorder %s205, 0
      %s208 = sadd.s32 %s207, 1
      %s209 = scalar_select %p206, %s207, %s208
      %p212 = pneg %p206
      %p213 = scmp.eq.s32.totalorder %s19, 1
      %p214 = por %p212, %p213
      %p215 = scmp.ne.s32.totalorder %s207, %s210
      %p216 = scmp.eq.s32.totalorder %s19, 0
      %p217 = por %p215, %p216
      %p218 = scmp.ne.s32.totalorder %s207, %s210
      %p219 = scmp.eq.s32.totalorder %s24, 1
      %p220 = por %p218, %p219
      %p221 = scmp.ne.s32.totalorder %s210, %s211
      %p222 = scmp.eq.s32.totalorder %s24, 0
      %p223 = por %p221, %p222
      %p224 = scmp.ne.s32.totalorder %s210, %s211
      %p225 = scmp.eq.s32.totalorder %s25, 1
      %p226 = por %p224, %p225
      %p228 = scmp.ne.s32.totalorder %s211, %s227
      %p229 = scmp.eq.s32.totalorder %s25, 0
      %p230 = por %p228, %p229
      %s231 = ssub.s32 %s19, %s26
      %p232 = scmp.eq.s32.totalorder %s231, 0
      %s234 = sadd.s32 %s233, 1
      %s235 = scalar_select %p232, %s233, %s234
      %p238 = pneg %p232
      %p239 = scmp.eq.s32.totalorder %s19, 1
      %p240 = por %p238, %p239
      %p241 = scmp.ne.s32.totalorder %s233, %s236
      %p242 = scmp.eq.s32.totalorder %s19, 0
      %p243 = por %p241, %p242
      %p244 = scmp.ne.s32.totalorder %s233, %s236
      %p245 = scmp.eq.s32.totalorder %s24, 1
      %p246 = por %p244, %p245
      %p247 = scmp.ne.s32.totalorder %s236, %s237
      %p248 = scmp.eq.s32.totalorder %s24, 0
      %p249 = por %p247, %p248
      %p250 = scmp.ne.s32.totalorder %s236, %s237
      %p251 = scmp.eq.s32.totalorder %s25, 1
      %p252 = por %p250, %p251
      %p254 = scmp.ne.s32.totalorder %s237, %s253
      %p255 = scmp.eq.s32.totalorder %s25, 0
      %p256 = por %p254, %p255
      %p257 = scmp.le.s32.totalorder 1, %s19
      %p258 = scmp.lt.s32.totalorder %s19, 3
      %p259 = pnand %p257, %p258
      %p260 = pneg %p259
      // Predicated region
      $region9: #{fc_inter_forward.1} parent=5 // pred_check
        _
      $region10: #{fc_inter_forward.1} parent=5 // pred_check_branch
        %262 = sbr.rel (%p259) target = $region12
      $region11: #{fc_inter_forward.1} parent=5 // pred_region
        %s263 = ssub.s32 %s19, 1
        // Predicated region
        $region13: #{fc_inter_forward.1} parent=11 // pred_check
          %p264 = pneg %p92
        $region14: #{fc_inter_forward.1} parent=11 // pred_check_branch
          %266 = sbr.rel (%p264) target = $region16
        $region15: #{fc_inter_forward.1} parent=11 // pred_region
          _
        $region16: #{fc_inter_forward.1} parent=11 // pred_fallthru
          _
        // Predicated region
        $region17: #{fc_inter_forward.1} parent=11 // pred_check
          %p267 = pneg %p113
        $region18: #{fc_inter_forward.1} parent=11 // pred_check_branch
          %269 = sbr.rel (%p267) target = $region20
        $region19: #{fc_inter_forward.1} parent=11 // pred_region
          _
        $region20: #{fc_inter_forward.1} parent=11 // pred_fallthru
          _
        // Predicated region
        $region21: #{fc_inter_forward.1} parent=11 // pred_check
          %p270 = pneg %p134
        $region22: #{fc_inter_forward.1} parent=11 // pred_check_branch
          %272 = sbr.rel (%p270) target = $region24
        $region23: #{fc_inter_forward.1} parent=11 // pred_region
          _
        $region24: #{fc_inter_forward.1} parent=11 // pred_fallthru
          _
        // Predicated region
        $region25: #{fc_inter_forward.1} parent=11 // pred_check
          %p273 = pneg %p155
        $region26: #{fc_inter_forward.1} parent=11 // pred_check_branch
          %275 = sbr.rel (%p273) target = $region28
        $region27: #{fc_inter_forward.1} parent=11 // pred_region
          _
        $region28: #{fc_inter_forward.1} parent=11 // pred_fallthru
          _
        // Predicated region
        $region29: #{fc_inter_forward.1} parent=11 // pred_check
          %p276 = pneg %p176
        $region30: #{fc_inter_forward.1} parent=11 // pred_check_branch
          %278 = sbr.rel (%p276) target = $region32
        $region31: #{fc_inter_forward.1} parent=11 // pred_region
          _
        $region32: #{fc_inter_forward.1} parent=11 // pred_fallthru
          _
        // Predicated region
        $region33: #{fc_inter_forward.1} parent=11 // pred_check
          %p279 = pneg %p197
        $region34: #{fc_inter_forward.1} parent=11 // pred_check_branch
          %281 = sbr.rel (%p279) target = $region36
        $region35: #{fc_inter_forward.1} parent=11 // pred_region
          _
        $region36: #{fc_inter_forward.1} parent=11 // pred_fallthru
          _
      $region12: #{fc_inter_forward.1} parent=5 // pred_fallthru
        _
      %p282 = scmp.lt.s32.totalorder %s19, 2
      // Predicated region
      $region37: #{fc_inter_forward.1} parent=5 // pred_check
        %p283 = pneg %p282
      $region38: #{fc_inter_forward.1} parent=5 // pred_check_branch
        %285 = sbr.rel (%p283) target = $region40
      $region39: #{fc_inter_forward.1} parent=5 // pred_region
        // Predicated region
        $region41: #{fc_inter_forward.1} parent=39 // pred_check
          %p286 = pneg %p39
        $region42: #{fc_inter_forward.1} parent=39 // pred_check_branch
          %288 = sbr.rel (%p286) target = $region44
        $region43: #{fc_inter_forward.1} parent=39 // pred_region
          %p289 = scmp.lt.s32.totalorder %s19, 1
          %s290 = scalar_select %p289, %s19, 1
          %s291 = smul.addr %s290, 8
          %s292 = scalar_lea.vmem %s0, %s291
        $region44: #{fc_inter_forward.1} parent=39 // pred_fallthru
          _
        // Predicated region
        $region45: #{fc_inter_forward.1} parent=39 // pred_check
          %p293 = pneg %p65
        $region46: #{fc_inter_forward.1} parent=39 // pred_check_branch
          %295 = sbr.rel (%p293) target = $region48
        $region47: #{fc_inter_forward.1} parent=39 // pred_region
          %p296 = scmp.lt.s32.totalorder %s19, 1
          %s297 = scalar_select %p296, %s19, 1
          %s298 = scalar_lea.vmem %s1, %s297
        $region48: #{fc_inter_forward.1} parent=39 // pred_fallthru
          _
      $region40: #{fc_inter_forward.1} parent=5 // pred_fallthru
        _
      %p299 = scmp.le.s32.totalorder 1, %s19
      %p300 = scmp.lt.s32.totalorder %s19, 3
      %p301 = pnand %p299, %p300
      %p302 = pneg %p301
      // Predicated region
      $region49: #{fc_inter_forward.1} parent=5 // pred_check
        _
      $region50: #{fc_inter_forward.1} parent=5 // pred_check_branch
        %304 = sbr.rel (%p301) target = $region52
      $region51: #{fc_inter_forward.1} parent=5 // pred_region
        %s305 = ssub.s32 %s19, 1
        %p306 = scmp.lt.s32.totalorder %s24, 1
        %s307 = scalar_select %p306, %s24, 1
        %s308 = smul.addr %s307, 8
        %s309 = scalar_lea.vmem %s0, %s308
        %p310 = pneg %p45
        %p311 = pneg %p42
        %p312 = scmp.lt.s32.totalorder %s24, 1
        %s313 = scalar_select %p312, %s24, 1
        %s314 = scalar_lea.vmem %s1, %s313
        %p315 = pneg %p71
        %p316 = pneg %p68
        %p317 = pneg %p92
        %p318 = pneg %p89
        %p319 = pneg %p113
        %p320 = pneg %p110
        %p321 = pneg %p134
        %p322 = pneg %p131
        %p323 = pneg %p155
        %p324 = pneg %p152
        %p325 = pneg %p176
        %p326 = pneg %p173
        %p327 = pneg %p197
        %p328 = pneg %p194
        %p329 = pneg %p223
        %p330 = pneg %p220
        %p331 = scmp.lt.s32.totalorder %s24, 1
        %s332 = scalar_select %p331, %s24, 1
        %s333 = smul.addr %s332, 8
        %s334 = scalar_lea.vmem %s8, %s333
        %p335 = pneg %p249
        %p336 = pneg %p246
        %s337 = sand.u32 %s236, 1
        %s338 = scalar_lea.sflag [#allocation3], %s337
        %s339 = sand.u32 %s236, 1
        %s340 = scalar_lea.vmem [#allocation2], %s339
        %p341 = scmp.lt.s32.totalorder %s24, 1
        %s342 = scalar_select %p341, %s24, 1
        %s343 = smul.addr %s342, 8
        %s344 = scalar_lea.vmem %s0, %s343
        %p345 = scmp.lt.s32.totalorder %s24, 1
        %s346 = scalar_select %p345, %s24, 1
        %s347 = scalar_lea.vmem %s1, %s346
        %p348 = scmp.lt.s32.totalorder %s24, 1
        %s349 = scalar_select %p348, %s24, 1
        %s350 = smul.addr %s349, 8
        %s351 = scalar_lea.vmem %s8, %s350
        %v352 = vld [vmem:[%s344] sm:$0xff]
        %v353 = vld [vmem:[%s2] sm:$0xff]
        %v354 = vld [vmem:[%s2 + $0x8] sm:$0xf]
        %v355 = vld [vmem:[%s3] sm:$0xff]
        %v356 = vld [vmem:[%s3 + $0x8] sm:$0xf]
        %v357 = vld [vmem:[%s4] sm:$0xff]
        %v358 = vld [vmem:[%s4 + $0x8] sm:$0xf]
        %v359 = vld [vmem:[%s5] sm:$0xff]
        %v360 = vld [vmem:[%s5 + $0x8] sm:$0xf]
        %362 = vrot.lane.b32.xlu0 %v352, 124
        %v363 = vpop.permute.xlu0 %362
        %vm365 = vcmask 31744
        %v366 = vsel %vm365, %v352, %v363
        %367 = vrot.lane.b32.xlu0 %v352, 120
        %v368 = vpop.permute.xlu0 %367
        %v370 = vsel %vm365, %v363, %v368
        %372 = vset.pattern.permute.xlu0 0
        %373 = vperm.xlu0 %372, %v355
        %v374 = vpop.permute.xlu0 %373
        %377 = vset.pattern.permute.xlu0 0
        %378 = vperm.xlu0 %377, %v356
        %v379 = vpop.permute.xlu0 %378
        %vm381 = vcmask 64512
        %v383 = vsel %vm381, %v353, 0
        %v386 = vsel %vm381, %v354, 0
        %388 = vmatpush.msra.mxu0 0.0
        %389 = vmatpush.msra.mxu0 0.0
        %390 = vmatpush.msra.mxu0 0.0
        %391 = vmatpush.msra.mxu0 0.0
        %392 = vmatpush.msra.mxu0 0.0
        %393 = vmatpush.msra.mxu0 0.0
        %394 = vmatpush.msra.mxu0 0.0
        %395 = vmatpush.msra.mxu0 0.0
        %396 = vmatpush.msra.mxu0 0.0
        %397 = vmatpush.msra.mxu0 0.0
        %398 = vmatpush.msra.mxu0 0.0
        %399 = vmatpush.msra.mxu0 0.0
        %400 = vmatpush.msra.mxu0 0.0
        %401 = vmatpush.msra.mxu0 0.0
        %402 = vmatpush.msra.mxu0 0.0
        %403 = vmatpush.msra.mxu0 %v366
        %404 = vmatmul.f32.gmra.mxu0 %v383
        %v405 = vpop.f32.mrf.mxu0
        %v406 = vadd.f32 %v374, %v405
        %407 = vmatmul.f32.gmra.mxu0 %v386
        %v408 = vpop.f32.mrf.mxu0
        %v409 = vadd.f32 %v379, %v408
        %410 = vdwg.mxu0
        %v411 = vmul.f32 %v406, 0.5
        %v412 = vmul.f32 %v409, 0.5
        %v413 = vmul.f32 %v406, 0.70710677
        %v414 = vmul.f32 %v409, 0.70710677
        %v415 = vmul.f32 %v413, %v413
        %v416 = vmin.f32 16.0, %v415
        %v417 = vmul.f32 %v416, 2.1237322e-06
        %v418 = vadd.f32 %v417, 0.00028619796
        %v419 = vmul.f32 %v416, %v418
        %v420 = vadd.f32 %v419, 0.0036580483
        %v421 = vmul.f32 %v416, %v420
        %v422 = vadd.f32 %v421, 0.05243302
        %v423 = vmul.f32 %v416, %v422
        %v424 = vadd.f32 %v423, 0.18741608
        %v425 = vmul.f32 %v416, %v424
        %v426 = vadd.f32 %v425, 1.1283791
        %v427 = vmul.f32 %v413, %v426
        %v428 = vmul.f32 %v416, 3.8918573e-05
        %v429 = vadd.f32 %v428, 0.001143296
        %v430 = vmul.f32 %v416, %v429
        %v431 = vadd.f32 %v430, 0.014752088
        %v432 = vmul.f32 %v416, %v431
        %v433 = vadd.f32 %v432, 0.112945676
        %v434 = vmul.f32 %v416, %v433
        %v435 = vadd.f32 %v434, 0.4994258
        %v436 = vmul.f32 %v416, %v435
        %v437 = vadd.f32 %v436, 1.0
        %v438 = vrcp.pop %v437
        %v439 = vmul.f32 %v437, %v438
        %v440 = vsub.f32 1.0, %v439
        %v441 = vmul.f32 %v438, %v440
        %v442 = vadd.f32 %v438, %v441
        %vm443 = vweird.f32 %v437
        %vm444 = vweird.f32 %v438
        %vm445 = vmor %vm443, %vm444
        %v446 = vsel %vm445, %v438, %v442
        %v447 = vand.u32 2147483647, %v437
        %vm448 = vcmp.eq.f32.partialorder %v447, 8.507059e+37
        %v449 = vand.u32 %v437, 2147483648
        %v450 = vor.u32 1.1754944e-38, %v449
        %v451 = vsel %vm448, %v450, %v446
        %v452 = vmul.f32 %v427, %v451
        %v453 = vmin.f32 %v452, 1.0
        %v454 = vmax.f32 %v453, -1.0
        %v455 = vmul.f32 %v414, %v414
        %v456 = vmin.f32 16.0, %v455
        %v457 = vmul.f32 %v456, 2.1237322e-06
        %v458 = vadd.f32 %v457, 0.00028619796
        %v459 = vmul.f32 %v456, %v458
        %v460 = vadd.f32 %v459, 0.0036580483
        %v461 = vmul.f32 %v456, %v460
        %v462 = vadd.f32 %v461, 0.05243302
        %v463 = vmul.f32 %v456, %v462
        %v464 = vadd.f32 %v463, 0.18741608
        %v465 = vmul.f32 %v456, %v464
        %v466 = vadd.f32 %v465, 1.1283791
        %v467 = vmul.f32 %v414, %v466
        %v468 = vmul.f32 %v456, 3.8918573e-05
        %v469 = vadd.f32 %v468, 0.001143296
        %v470 = vmul.f32 %v456, %v469
        %v471 = vadd.f32 %v470, 0.014752088
        %v472 = vmul.f32 %v456, %v471
        %v473 = vadd.f32 %v472, 0.112945676
        %v474 = vmul.f32 %v456, %v473
        %v475 = vadd.f32 %v474, 0.4994258
        %v476 = vmul.f32 %v456, %v475
        %v477 = vadd.f32 %v476, 1.0
        %v478 = vrcp.pop %v477
        %v479 = vmul.f32 %v477, %v478
        %v480 = vsub.f32 1.0, %v479
        %v481 = vmul.f32 %v478, %v480
        %v482 = vadd.f32 %v478, %v481
        %vm483 = vweird.f32 %v477
        %vm484 = vweird.f32 %v478
        %vm485 = vmor %vm483, %vm484
        %v486 = vsel %vm485, %v478, %v482
        %v487 = vand.u32 2147483647, %v477
        %vm488 = vcmp.eq.f32.partialorder %v487, 8.507059e+37
        %v489 = vand.u32 %v477, 2147483648
        %v490 = vor.u32 1.1754944e-38, %v489
        %v491 = vsel %vm488, %v490, %v486
        %v492 = vmul.f32 %v467, %v491
        %v493 = vmin.f32 %v492, 1.0
        %v494 = vmax.f32 %v493, -1.0
        %v495 = vadd.f32 %v454, 1.0
        %v496 = vadd.f32 %v494, 1.0
        %v497 = vmul.f32 %v411, %v495
        %v498 = vmul.f32 %v412, %v496
        %500 = vset.pattern.permute.xlu0 0
        %501 = vperm.xlu0 %500, %v359
        %v502 = vpop.permute.xlu0 %501
        %505 = vset.pattern.permute.xlu0 0
        %506 = vperm.xlu0 %505, %v360
        %v507 = vpop.permute.xlu0 %506
        %v510 = vsel %vm381, %v357, 0
        %v513 = vsel %vm381, %v358, 0
        %515 = vmatpush.msra.mxu0 0.0
        %516 = vmatpush.msra.mxu0 0.0
        %517 = vmatpush.msra.mxu0 0.0
        %518 = vmatpush.msra.mxu0 0.0
        %519 = vmatpush.msra.mxu0 0.0
        %520 = vmatpush.msra.mxu0 0.0
        %521 = vmatpush.msra.mxu0 0.0
        %522 = vmatpush.msra.mxu0 0.0
        %523 = vmatpush.msra.mxu0 0.0
        %524 = vmatpush.msra.mxu0 0.0
        %525 = vmatpush.msra.mxu0 0.0
        %526 = vmatpush.msra.mxu0 0.0
        %527 = vmatpush.msra.mxu0 0.0
        %528 = vmatpush.msra.mxu0 0.0
        %529 = vmatpush.msra.mxu0 0.0
        %530 = vmatpush.msra.mxu0 %v370
        %531 = vmatmul.f32.gmra.mxu0 %v510
        %v532 = vpop.f32.mrf.mxu0
        %v533 = vadd.f32 %v502, %v532
        %534 = vmatmul.f32.gmra.mxu0 %v513
        %v535 = vpop.f32.mrf.mxu0
        %v536 = vadd.f32 %v507, %v535
        %537 = vdwg.mxu0
        %v538 = vmul.f32 %v533, 0.5
        %v539 = vmul.f32 %v536, 0.5
        %v540 = vmul.f32 %v533, 0.70710677
        %v541 = vmul.f32 %v536, 0.70710677
        %v542 = vmul.f32 %v540, %v540
        %v543 = vmin.f32 16.0, %v542
        %v544 = vmul.f32 %v543, 2.1237322e-06
        %v545 = vadd.f32 %v544, 0.00028619796
        %v546 = vmul.f32 %v543, %v545
        %v547 = vadd.f32 %v546, 0.0036580483
        %v548 = vmul.f32 %v543, %v547
        %v549 = vadd.f32 %v548, 0.05243302
        %v550 = vmul.f32 %v543, %v549
        %v551 = vadd.f32 %v550, 0.18741608
        %v552 = vmul.f32 %v543, %v551
        %v553 = vadd.f32 %v552, 1.1283791
        %v554 = vmul.f32 %v540, %v553
        %v555 = vmul.f32 %v543, 3.8918573e-05
        %v556 = vadd.f32 %v555, 0.001143296
        %v557 = vmul.f32 %v543, %v556
        %v558 = vadd.f32 %v557, 0.014752088
        %v559 = vmul.f32 %v543, %v558
        %v560 = vadd.f32 %v559, 0.112945676
        %v561 = vmul.f32 %v543, %v560
        %v562 = vadd.f32 %v561, 0.4994258
        %v563 = vmul.f32 %v543, %v562
        %v564 = vadd.f32 %v563, 1.0
        %v565 = vrcp.pop %v564
        %v566 = vmul.f32 %v564, %v565
        %v567 = vsub.f32 1.0, %v566
        %v568 = vmul.f32 %v565, %v567
        %v569 = vadd.f32 %v565, %v568
        %vm570 = vweird.f32 %v564
        %vm571 = vweird.f32 %v565
        %vm572 = vmor %vm570, %vm571
        %v573 = vsel %vm572, %v565, %v569
        %v574 = vand.u32 2147483647, %v564
        %vm575 = vcmp.eq.f32.partialorder %v574, 8.507059e+37
        %v576 = vand.u32 %v564, 2147483648
        %v577 = vor.u32 1.1754944e-38, %v576
        %v578 = vsel %vm575, %v577, %v573
        %v579 = vmul.f32 %v554, %v578
        %v580 = vmin.f32 %v579, 1.0
        %v581 = vmax.f32 %v580, -1.0
        %v582 = vmul.f32 %v541, %v541
        %v583 = vmin.f32 16.0, %v582
        %v584 = vmul.f32 %v583, 2.1237322e-06
        %v585 = vadd.f32 %v584, 0.00028619796
        %v586 = vmul.f32 %v583, %v585
        %v587 = vadd.f32 %v586, 0.0036580483
        %v588 = vmul.f32 %v583, %v587
        %v589 = vadd.f32 %v588, 0.05243302
        %v590 = vmul.f32 %v583, %v589
        %v591 = vadd.f32 %v590, 0.18741608
        %v592 = vmul.f32 %v583, %v591
        %v593 = vadd.f32 %v592, 1.1283791
        %v594 = vmul.f32 %v541, %v593
        %v595 = vmul.f32 %v583, 3.8918573e-05
        %v596 = vadd.f32 %v595, 0.001143296
        %v597 = vmul.f32 %v583, %v596
        %v598 = vadd.f32 %v597, 0.014752088
        %v599 = vmul.f32 %v583, %v598
        %v600 = vadd.f32 %v599, 0.112945676
        %v601 = vmul.f32 %v583, %v600
        %v602 = vadd.f32 %v601, 0.4994258
        %v603 = vmul.f32 %v583, %v602
        %v604 = vadd.f32 %v603, 1.0
        %v605 = vrcp.pop %v604
        %v606 = vmul.f32 %v604, %v605
        %v607 = vsub.f32 1.0, %v606
        %v608 = vmul.f32 %v605, %v607
        %v609 = vadd.f32 %v605, %v608
        %vm610 = vweird.f32 %v604
        %vm611 = vweird.f32 %v605
        %vm612 = vmor %vm610, %vm611
        %v613 = vsel %vm612, %v605, %v609
        %v614 = vand.u32 2147483647, %v604
        %vm615 = vcmp.eq.f32.partialorder %v614, 8.507059e+37
        %v616 = vand.u32 %v604, 2147483648
        %v617 = vor.u32 1.1754944e-38, %v616
        %v618 = vsel %vm615, %v617, %v613
        %v619 = vmul.f32 %v594, %v618
        %v620 = vmin.f32 %v619, 1.0
        %v621 = vmax.f32 %v620, -1.0
        %v622 = vadd.f32 %v581, 1.0
        %v623 = vadd.f32 %v621, 1.0
        %v624 = vmul.f32 %v538, %v622
        %v625 = vmul.f32 %v539, %v623
        %vm628 = vcmask 1041408
        %v629 = vrot.slane %v497, 6
        %v630 = vrot.slane %v498, 6
        %v631 = vsel %vm628, %v629, %v630
        %632 = vrot.lane.b32.xlu0 %v631, 4
        %v633 = vpop.permute.xlu0 %632
        %636 = vrot.lane.b32.xlu0 %v624, 8
        %v637 = vpop.permute.xlu0 %636
        %v640 = vrot.slane %v624, 6
        %v641 = vrot.slane %v625, 6
        %v642 = vsel %vm628, %v640, %v641
        %643 = vrot.lane.b32.xlu0 %v642, 12
        %v644 = vpop.permute.xlu0 %643
        %646 = vrot.lane.b32.xlu0 %v497, 12
        %v647 = vpop.permute.xlu0 %646
        %649 = vrot.lane.b32.xlu0 %v631, 16
        %v650 = vpop.permute.xlu0 %649
        %652 = vrot.lane.b32.xlu0 %v624, 20
        %v653 = vpop.permute.xlu0 %652
        %655 = vrot.lane.b32.xlu0 %v642, 24
        %v656 = vpop.permute.xlu0 %655
        %v658 = vsel %vm365, %v497, %v633
        %v659 = vsel %vm381, %v658, %v637
        %vm660 = vcmask 97280
        %v661 = vsel %vm660, %v659, %v644
        %vm662 = vcmask 130048
        %v663 = vsel %vm662, %v661, %v647
        %vm664 = vcmask 162816
        %v665 = vsel %vm664, %v663, %v650
        %vm666 = vcmask 195584
        %v667 = vsel %vm666, %v665, %v653
        %vm668 = vcmask 228352
        %v669 = vsel %vm668, %v667, %v656
        %vm670 = vcmask 259072
        %671 = vst.msk [vmem:[%s351] sm:$0x3f] %vm670, %v669
        %v672 = vld [vmem:[%s347] sm:$0x1]
        %v673 = vld [vmem:[%s6] sm:$0xff]
        %v674 = vld [vmem:[%s6 + $0x8] sm:$0xff]
        %v675 = vld [vmem:[%s7] sm:$0x1]
        %v677 = vsel %vm662, %v672, 0
        %679 = vmatpush.msra.mxu0 0.0
        %680 = vmatpush.msra.mxu0 0.0
        %681 = vmatpush.msra.mxu0 0.0
        %682 = vmatpush.msra.mxu0 0.0
        %683 = vmatpush.msra.mxu0 0.0
        %684 = vmatpush.msra.mxu0 0.0
        %685 = vmatpush.msra.mxu0 0.0
        %686 = vmatpush.msra.mxu0 0.0
        %687 = vmatpush.msra.mxu0 0.0
        %688 = vmatpush.msra.mxu0 0.0
        %689 = vmatpush.msra.mxu0 0.0
        %690 = vmatpush.msra.mxu0 0.0
        %691 = vmatpush.msra.mxu0 0.0
        %692 = vmatpush.msra.mxu0 0.0
        %693 = vmatpush.msra.mxu0 %v674
        %694 = vmatpush.msra.mxu0 %v673
        %695 = vmatmul.f32.gmra.mxu0 %v677
        %v696 = vpop.f32.mrf.mxu0
        %v697 = vadd.f32 %v675, %v696
        %698 = vdwg.mxu0
        %vm699 = vcmask 253952
        %700 = vst.msk [vmem:[%s340] sm:$0x1] %vm699, %v697
        %p701 = scmp.lt.s32.totalorder %s24, 1
        %s702 = scalar_select %p701, %s24, 1
        %s703 = smul.addr %s702, 8
        %s704 = scalar_lea.vmem %s8, %s703
        %s705 = sand.u32 %s236, 1
        %s706 = scalar_lea.sflag [#allocation3], %s705
        %s707 = sand.u32 %s236, 1
        %s708 = scalar_lea.vmem [#allocation2], %s707
        // Predicated region
        $region53: #{fc_inter_forward.1} parent=51 // pred_check
          %p709 = pneg %p220
        $region54: #{fc_inter_forward.1} parent=51 // pred_check_branch
          %711 = sbr.rel (%p709) target = $region56
        $region55: #{fc_inter_forward.1} parent=51 // pred_region
          _
        $region56: #{fc_inter_forward.1} parent=51 // pred_fallthru
          _
        // Predicated region
        $region57: #{fc_inter_forward.1} parent=51 // pred_check
          %p712 = pneg %p246
        $region58: #{fc_inter_forward.1} parent=51 // pred_check_branch
          %714 = sbr.rel (%p712) target = $region60
        $region59: #{fc_inter_forward.1} parent=51 // pred_region
          %716 = vsyncadd %s706, 0
          %s717 = scalar_lea.hbm %s9, %s24
          %s719 = sshll.u32 %s708, 4
          %s720 = int_to_ptr.vmem [resolvable:$true] %s719
          %s721 = sshll.u32 %s717, 4
          %s722 = int_to_ptr.hbm [resolvable:$true] %s721
          %724 = dma.vmem_to_hbm [thread:$0]  %s720, 16, %s722, %s706
        $region60: #{fc_inter_forward.1} parent=51 // pred_fallthru
          _
      $region52: #{fc_inter_forward.1} parent=5 // pred_fallthru
        _
      %p725 = scmp.le.s32.totalorder 2, %s19
      // Predicated region
      $region61: #{fc_inter_forward.1} parent=5 // pred_check
        %p726 = pneg %p725
      $region62: #{fc_inter_forward.1} parent=5 // pred_check_branch
        %728 = sbr.rel (%p726) target = $region64
      $region63: #{fc_inter_forward.1} parent=5 // pred_region
        %s729 = ssub.s32 %s19, 2
        // Predicated region
        $region65: #{fc_inter_forward.1} parent=63 // pred_check
          %p730 = pneg %p226
        $region66: #{fc_inter_forward.1} parent=63 // pred_check_branch
          %732 = sbr.rel (%p730) target = $region68
        $region67: #{fc_inter_forward.1} parent=63 // pred_region
          %p733 = scmp.lt.s32.totalorder %s25, 1
          %s734 = scalar_select %p733, %s25, 1
          %s735 = smul.addr %s734, 8
          %s736 = scalar_lea.vmem %s8, %s735
        $region68: #{fc_inter_forward.1} parent=63 // pred_fallthru
          _
        // Predicated region
        $region69: #{fc_inter_forward.1} parent=63 // pred_check
          %p737 = pneg %p252
        $region70: #{fc_inter_forward.1} parent=63 // pred_check_branch
          %739 = sbr.rel (%p737) target = $region72
        $region71: #{fc_inter_forward.1} parent=63 // pred_region
          %s740 = sand.u32 %s237, 1
          %s741 = scalar_lea.sflag [#allocation3], %s740
          %s742 = sand.u32 %s237, 1
          %s743 = scalar_lea.vmem [#allocation2], %s742
          %745 = dma.done %s741, 16
        $region72: #{fc_inter_forward.1} parent=63 // pred_fallthru
          _
      $region64: #{fc_inter_forward.1} parent=5 // pred_fallthru
        _
    $region6: #{fc_inter_forward.1} parent=1 // loop_footer
      %s23 = sadd.s32 1, %s19
    $region7: #{fc_inter_forward.1} parent=1 // loop_footer_branch
      %18 = sbr.rel target = $region3
    $region8: #{fc_inter_forward.1} parent=1 // loop_exit
      _
    %746 = vsyncpa [#allocation3], 1
    %s747 = scalar_lea.sflag [#allocation3], 1
    %748 = vsyncpa %s747, 1

</llo_original>
